<compile_context>
chip_gen: v7x
topology: tpu7x:2x2x1
jax: 0.10.0
libtpu: 0.0.40
codegen_flags: <defaults>
</compile_context>

<pallas_src>
import math
import functools

import jax
import jax.numpy as jnp
from jax import lax
from jax.experimental import pallas as pl
from jax.experimental.pallas import tpu as pltpu


def _erf(x):
    # Abramowitz & Stegun 7.1.26 polynomial (|err| < 1.5e-7), VPU + EUP ops only.
    # TODO(synk): no native erf lowering in Mosaic; polynomial stands in for
    # torch.distributions.Normal.cdf's erf.
    a1 = 0.254829592
    a2 = -0.284496736
    a3 = 1.421413741
    a4 = -1.453152027
    a5 = 1.061405429
    p = 0.3275911
    ax = jnp.abs(x)
    t = pl.reciprocal(1.0 + p * ax, approx=True)   # EUP slot (otherwise idle)
    poly = ((((a5 * t + a4) * t + a3) * t + a2) * t + a1) * t
    y = 1.0 - poly * jnp.exp(-(ax * ax))           # exp also on EUP
    return jnp.where(x >= 0.0, y, -y)


def _pairwise_max_sum(g, n):
    """q with sum_i q_i == sum over unordered pairs {i,j} of max(g_i, g_j),
    computed per column with floor(n/2) sublane rolls (S_s == S_{n-s})."""
    q = None
    for s in range(1, (n - 1) // 2 + 1):           # full-weight shifts
        t = jnp.maximum(g, pltpu.roll(g, s, axis=0))
        q = t if q is None else q + t
    if n >= 2 and n % 2 == 0:                      # shift n/2 counted half
        t = jnp.maximum(g, pltpu.roll(g, n // 2, axis=0))
        q = 0.5 * t if q is None else q + 0.5 * t
    if q is None:                                  # n == 1: no pairs
        q = jnp.zeros_like(g)
    return q


def _adaptive_shaping_kernel(params_ref, x_ref, out_ref, *, n, m, tm, chunk,
                             padded):
    """params_ref: (2,) SMEM [mean, 1/(std*sqrt(2))];
       x_ref: (n, tm) VMEM tile; out_ref: (1, n, 128) per-block partial sums."""
    i = pl.program_id(0)
    mean = params_ref[0]
    inv_std_sqrt2 = params_ref[1]
    num_chunks = tm // chunk
    lanes = chunk // 128

    # Per-element contribution in g = erf(.) space (c = 0.5 + 0.5*g):
    #   e_i = 0.25*g^2 + A*g - B*q_i  (+ C, added once in the wrapper)
    # with A = (n-1)/(2(n+1)), B = 1/(n+1), C = 1/4 - (n+2)/(6(n+1)).
    A = (n - 1.0) / (2.0 * (n + 1.0))
    B = 1.0 / (n + 1.0)

    # Hoisted loop-invariant iota (only needed for tail masking).
    lane = (lax.broadcasted_iota(jnp.int32, (n, chunk), 1) + i * tm
            if padded else None)

    def chunk_body(c_idx, acc):
        off = c_idx * chunk
        x = x_ref[:, pl.ds(pl.multiple_of(off, chunk), chunk)]
        g = _erf((x - mean) * inv_std_sqrt2)
        q = _pairwise_max_sum(g, n)                # floor(n/2) XLU rolls
        e = (0.25 * g + A) * g - B * q
        if padded:
            e = jnp.where(lane + off < m, e, 0.0)
        # Fold the chunk's lane groups into the (n, 128) accumulator.
        for j in range(lanes):
            acc = acc + e[:, j * 128:(j + 1) * 128]
        return acc

    acc = lax.fori_loop(0, num_chunks, chunk_body,
                        jnp.zeros((n, 128), jnp.float32),
                        unroll=min(num_chunks, 8))

    out_ref[...] = acc[jnp.newaxis]                # lane-dense (1, n, 128) store


def adaptive_shaping_loss(x, mean_arg, sp_arg, *, mean_loss=True, training=True,
                          lane_chunk=512, target_block_bytes=2 * 1024 * 1024):
    """JAX wrapper mirroring AdaptiveShapingModule.forward (axis=0)."""
    if not training:
        # eval-mode branch of the module: returns 0.0
        return jnp.zeros((), jnp.float32)

    n = int(x.shape[0])
    m = 1
    for s in x.shape[1:]:
        m *= int(s)
    x2 = x.reshape(n, m).astype(jnp.float32)

    # ---- tile sizing: big blocks (amortize ~0.35us/grid-step), bounded so ----
    # ---- two double-buffered input blocks stay far under scoped VMEM on   ----
    # ---- v5e/v6e/v7x; balanced tm keeps padding below one chunk per block ----
    chunk = lane_chunk
    tm_max = max(chunk, (target_block_bytes // (4 * n)) // chunk * chunk)
    m_ceil = pl.cdiv(m, chunk) * chunk
    grid_n = pl.cdiv(m_ceil, tm_max)
    tm = pl.cdiv(m_ceil, grid_n * chunk) * chunk
    m_pad = grid_n * tm
    if m_pad != m:
        x2 = jnp.pad(x2, ((0, 0), (0, m_pad - m)))

    # Scalars go to SMEM (no host sync, stays jit-traceable).
    mean = jnp.asarray(mean_arg, jnp.float32).reshape(())
    inv_std_sqrt2 = (jnp.exp(-jnp.asarray(sp_arg, jnp.float32)).reshape(())
                     * jnp.float32(1.0 / math.sqrt(2.0)))
    params = jnp.stack([mean, inv_std_sqrt2])

    kernel = functools.partial(
        _adaptive_shaping_kernel,
        n=n, m=m, tm=tm, chunk=chunk, padded=(m_pad != m))

    partials = pl.pallas_call(
        kernel,
        out_shape=jax.ShapeDtypeStruct((grid_n, n, 128), jnp.float32),
        grid_spec=pltpu.PrefetchScalarGridSpec(
            num_scalar_prefetch=0,
            grid=(grid_n,),
            in_specs=[
                pl.BlockSpec(memory_space=pltpu.MemorySpace.SMEM),   # params
                pl.BlockSpec((n, tm), lambda i: (0, i)),             # x tile
            ],
            out_specs=pl.BlockSpec((1, n, 128), lambda i: (i, 0, 0)),
        ),
        compiler_params=pltpu.CompilerParams(
            dimension_semantics=("parallel",),        # independent column tiles
            vmem_limit_bytes=32 * 1024 * 1024,
        ),
    )(params, x2)

    # Constant term folded out of the kernel: C = 1/4 - (n+2)/(6*(n+1)) per
    # real (unpadded) element.
    C = 0.25 - (n + 2.0) / (6.0 * (n + 1.0))
    total = jnp.sum(partials) + jnp.float32(C * n * m)
    if mean_loss:
        return total / jnp.float32(n * m)
    return total


if __name__ == "__main__":
    key = jax.random.PRNGKey(0)
    N, C, H, W = 8, 4, 16, 16
    x = jax.random.normal(key, (N, C, H, W), dtype=jnp.float32) * 5.0

    # Parameter init matching AdaptiveShapingModule.__init__ (buffer path):
    # mean_arg = 0.0, sp_arg = log(10.0).
    mean_arg = jnp.float32(0.0)
    sp_arg = jnp.log(jnp.float32(10.0))

    loss_fn = jax.jit(functools.partial(adaptive_shaping_loss,
                                        mean_loss=True, training=True))
    loss = loss_fn(x, mean_arg, sp_arg)
    loss = jax.block_until_ready(loss)

    # Silent pure-JAX reference check (sort-based, exact erf).  Tolerance covers
    # the in-kernel A&S erf polynomial + approximate-reciprocal path while still
    # catching rank/target/scaling bugs (those produce >1e-2 errors).
    z = jnp.sort(x.reshape(N, -1), axis=0)
    std_ref = jnp.exp(sp_arg)
    cdf_ref = 0.5 * (1.0 + jax.scipy.special.erf(
        (z - mean_arg) / (std_ref * jnp.sqrt(2.0))))
    tgt_ref = (jnp.arange(1, N + 1, dtype=jnp.float32) / (N + 1.0)).reshape(N, 1)
    ref = jnp.mean((cdf_ref - tgt_ref) ** 2)
    assert abs(float(loss) - float(ref)) < 2e-3 * max(1.0, abs(float(ref))), (
        float(loss), float(ref))

    print("KERNEL_OK")
</pallas_src>

<mosaic_0001>
module attributes {stable_mosaic.version = 11 : i64} {
  func.func @_adaptive_shaping_kernel(%arg0: i32, %arg1: memref<2xf32, #tpu.memory_space<smem>>, %arg2: memref<8x1024xf32, #tpu.memory_space<vmem>>, %arg3: memref<1x8x128xf32, #tpu.memory_space<vmem>>) attributes {dimension_semantics = [#tpu.dimension_semantics<parallel>], iteration_bounds = array<i64: 1>, scalar_prefetch = 0 : i64, scratch_operands = 0 : i64, tpu.core_type = #tpu.core_type<tc>, window_params = [{transform_indices = @transform_0, window_bounds = array<i64: 2>}, {transform_indices = @transform_1, window_bounds = array<i64: 8, 1024>}, {transform_indices = @transform_2, window_bounds = array<i64: 1, 8, 128>}]} {
    %c0 = arith.constant 0 : index
    %0 = memref.load %arg1[%c0] : memref<2xf32, #tpu.memory_space<smem>>
    %c1 = arith.constant 1 : index
    %1 = memref.load %arg1[%c1] : memref<2xf32, #tpu.memory_space<smem>>
    %cst = arith.constant 0.000000e+00 : f32
    %2 = vector.broadcast %cst : f32 to vector<8x128xf32>
    %c0_i32 = arith.constant 0 : i32
    %c512_i32 = arith.constant 512 : i32
    %3 = arith.muli %c0_i32, %c512_i32 : i32
    %4 = tpu.assume_multiple %3, 512 : i32
    %c0_0 = arith.constant 0 : index
    %5 = arith.index_cast %4 : i32 to index
    %6 = vector.load %arg2[%c0_0, %5] : memref<8x1024xf32, #tpu.memory_space<vmem>>, vector<8x512xf32>
    %7 = vector.broadcast %0 : f32 to vector<8x512xf32>
    %8 = arith.subf %6, %7 : vector<8x512xf32>
    %9 = vector.broadcast %1 : f32 to vector<8x512xf32>
    %10 = arith.mulf %8, %9 : vector<8x512xf32>
    %11 = math.absf %10 : vector<8x512xf32>
    %cst_1 = arith.constant 0.327591091 : f32
    %12 = vector.broadcast %cst_1 : f32 to vector<8x512xf32>
    %13 = arith.mulf %12, %11 : vector<8x512xf32>
    %cst_2 = arith.constant 1.000000e+00 : f32
    %14 = vector.broadcast %cst_2 : f32 to vector<8x512xf32>
    %15 = arith.addf %14, %13 : vector<8x512xf32>
    %16 = tpu.reciprocal %15 {approx = true} : vector<8x512xf32> -> vector<8x512xf32>
    %cst_3 = arith.constant 1.06140542 : f32
    %17 = vector.broadcast %cst_3 : f32 to vector<8x512xf32>
    %18 = arith.mulf %17, %16 : vector<8x512xf32>
    %cst_4 = arith.constant -1.45315206 : f32
    %19 = vector.broadcast %cst_4 : f32 to vector<8x512xf32>
    %20 = arith.addf %18, %19 : vector<8x512xf32>
    %21 = arith.mulf %20, %16 : vector<8x512xf32>
    %cst_5 = arith.constant 1.42141378 : f32
    %22 = vector.broadcast %cst_5 : f32 to vector<8x512xf32>
    %23 = arith.addf %21, %22 : vector<8x512xf32>
    %24 = arith.mulf %23, %16 : vector<8x512xf32>
    %cst_6 = arith.constant -0.284496725 : f32
    %25 = vector.broadcast %cst_6 : f32 to vector<8x512xf32>
    %26 = arith.addf %24, %25 : vector<8x512xf32>
    %27 = arith.mulf %26, %16 : vector<8x512xf32>
    %cst_7 = arith.constant 0.254829586 : f32
    %28 = vector.broadcast %cst_7 : f32 to vector<8x512xf32>
    %29 = arith.addf %27, %28 : vector<8x512xf32>
    %30 = arith.mulf %29, %16 : vector<8x512xf32>
    %31 = arith.mulf %11, %11 : vector<8x512xf32>
    %cst_8 = arith.constant 0.000000e+00 : f32
    %32 = vector.broadcast %cst_8 : f32 to vector<8x512xf32>
    %33 = arith.subf %32, %31 : vector<8x512xf32>
    %34 = math.exp %33 : vector<8x512xf32>
    %35 = arith.mulf %30, %34 : vector<8x512xf32>
    %cst_9 = arith.constant 1.000000e+00 : f32
    %36 = vector.broadcast %cst_9 : f32 to vector<8x512xf32>
    %37 = arith.subf %36, %35 : vector<8x512xf32>
    %cst_10 = arith.constant 0.000000e+00 : f32
    %38 = vector.broadcast %cst_10 : f32 to vector<8x512xf32>
    %39 = arith.cmpf oge, %10, %38 : vector<8x512xf32>
    %cst_11 = arith.constant 0.000000e+00 : f32
    %40 = vector.broadcast %cst_11 : f32 to vector<8x512xf32>
    %41 = arith.subf %40, %37 : vector<8x512xf32>
    %42 = arith.select %39, %37, %41 : vector<8x512xi1>, vector<8x512xf32>
    %c1_i32 = arith.constant 1 : i32
    %43 = tpu.dynamic_rotate %42 by %c1_i32 dim 0 : vector<8x512xf32>, i32 -> vector<8x512xf32>
    %44 = arith.maximumf %42, %43 : vector<8x512xf32>
    %c2_i32 = arith.constant 2 : i32
    %45 = tpu.dynamic_rotate %42 by %c2_i32 dim 0 : vector<8x512xf32>, i32 -> vector<8x512xf32>
    %46 = arith.maximumf %42, %45 : vector<8x512xf32>
    %47 = arith.addf %44, %46 : vector<8x512xf32>
    %c3_i32 = arith.constant 3 : i32
    %48 = tpu.dynamic_rotate %42 by %c3_i32 dim 0 : vector<8x512xf32>, i32 -> vector<8x512xf32>
    %49 = arith.maximumf %42, %48 : vector<8x512xf32>
    %50 = arith.addf %47, %49 : vector<8x512xf32>
    %c4_i32 = arith.constant 4 : i32
    %51 = tpu.dynamic_rotate %42 by %c4_i32 dim 0 : vector<8x512xf32>, i32 -> vector<8x512xf32>
    %52 = arith.maximumf %42, %51 : vector<8x512xf32>
    %cst_12 = arith.constant 5.000000e-01 : f32
    %53 = vector.broadcast %cst_12 : f32 to vector<8x512xf32>
    %54 = arith.mulf %53, %52 : vector<8x512xf32>
    %55 = arith.addf %50, %54 : vector<8x512xf32>
    %cst_13 = arith.constant 2.500000e-01 : f32
    %56 = vector.broadcast %cst_13 : f32 to vector<8x512xf32>
    %57 = arith.mulf %56, %42 : vector<8x512xf32>
    %cst_14 = arith.constant 0.388888896 : f32
    %58 = vector.broadcast %cst_14 : f32 to vector<8x512xf32>
    %59 = arith.addf %57, %58 : vector<8x512xf32>
    %60 = arith.mulf %59, %42 : vector<8x512xf32>
    %cst_15 = arith.constant 0.111111112 : f32
    %61 = vector.broadcast %cst_15 : f32 to vector<8x512xf32>
    %62 = arith.mulf %61, %55 : vector<8x512xf32>
    %63 = arith.subf %60, %62 : vector<8x512xf32>
    %64 = vector.extract_strided_slice %63 {offsets = [0, 0], sizes = [8, 128], strides = [1, 1]} : vector<8x512xf32> to vector<8x128xf32>
    %65 = arith.addf %2, %64 : vector<8x128xf32>
    %66 = vector.extract_strided_slice %63 {offsets = [0, 128], sizes = [8, 128], strides = [1, 1]} : vector<8x512xf32> to vector<8x128xf32>
    %67 = arith.addf %65, %66 : vector<8x128xf32>
    %68 = vector.extract_strided_slice %63 {offsets = [0, 256], sizes = [8, 128], strides = [1, 1]} : vector<8x512xf32> to vector<8x128xf32>
    %69 = arith.addf %67, %68 : vector<8x128xf32>
    %70 = vector.extract_strided_slice %63 {offsets = [0, 384], sizes = [8, 128], strides = [1, 1]} : vector<8x512xf32> to vector<8x128xf32>
    %71 = arith.addf %69, %70 : vector<8x128xf32>
    %c1_i32_16 = arith.constant 1 : i32
    %c512_i32_17 = arith.constant 512 : i32
    %72 = arith.muli %c1_i32_16, %c512_i32_17 : i32
    %73 = tpu.assume_multiple %72, 512 : i32
    %c0_18 = arith.constant 0 : index
    %74 = arith.index_cast %73 : i32 to index
    %75 = vector.load %arg2[%c0_18, %74] : memref<8x1024xf32, #tpu.memory_space<vmem>>, vector<8x512xf32>
    %76 = vector.broadcast %0 : f32 to vector<8x512xf32>
    %77 = arith.subf %75, %76 : vector<8x512xf32>
    %78 = vector.broadcast %1 : f32 to vector<8x512xf32>
    %79 = arith.mulf %77, %78 : vector<8x512xf32>
    %80 = math.absf %79 : vector<8x512xf32>
    %cst_19 = arith.constant 0.327591091 : f32
    %81 = vector.broadcast %cst_19 : f32 to vector<8x512xf32>
    %82 = arith.mulf %81, %80 : vector<8x512xf32>
    %cst_20 = arith.constant 1.000000e+00 : f32
    %83 = vector.broadcast %cst_20 : f32 to vector<8x512xf32>
    %84 = arith.addf %83, %82 : vector<8x512xf32>
    %85 = tpu.reciprocal %84 {approx = true} : vector<8x512xf32> -> vector<8x512xf32>
    %cst_21 = arith.constant 1.06140542 : f32
    %86 = vector.broadcast %cst_21 : f32 to vector<8x512xf32>
    %87 = arith.mulf %86, %85 : vector<8x512xf32>
    %cst_22 = arith.constant -1.45315206 : f32
    %88 = vector.broadcast %cst_22 : f32 to vector<8x512xf32>
    %89 = arith.addf %87, %88 : vector<8x512xf32>
    %90 = arith.mulf %89, %85 : vector<8x512xf32>
    %cst_23 = arith.constant 1.42141378 : f32
    %91 = vector.broadcast %cst_23 : f32 to vector<8x512xf32>
    %92 = arith.addf %90, %91 : vector<8x512xf32>
    %93 = arith.mulf %92, %85 : vector<8x512xf32>
    %cst_24 = arith.constant -0.284496725 : f32
    %94 = vector.broadcast %cst_24 : f32 to vector<8x512xf32>
    %95 = arith.addf %93, %94 : vector<8x512xf32>
    %96 = arith.mulf %95, %85 : vector<8x512xf32>
    %cst_25 = arith.constant 0.254829586 : f32
    %97 = vector.broadcast %cst_25 : f32 to vector<8x512xf32>
    %98 = arith.addf %96, %97 : vector<8x512xf32>
    %99 = arith.mulf %98, %85 : vector<8x512xf32>
    %100 = arith.mulf %80, %80 : vector<8x512xf32>
    %cst_26 = arith.constant 0.000000e+00 : f32
    %101 = vector.broadcast %cst_26 : f32 to vector<8x512xf32>
    %102 = arith.subf %101, %100 : vector<8x512xf32>
    %103 = math.exp %102 : vector<8x512xf32>
    %104 = arith.mulf %99, %103 : vector<8x512xf32>
    %cst_27 = arith.constant 1.000000e+00 : f32
    %105 = vector.broadcast %cst_27 : f32 to vector<8x512xf32>
    %106 = arith.subf %105, %104 : vector<8x512xf32>
    %cst_28 = arith.constant 0.000000e+00 : f32
    %107 = vector.broadcast %cst_28 : f32 to vector<8x512xf32>
    %108 = arith.cmpf oge, %79, %107 : vector<8x512xf32>
    %cst_29 = arith.constant 0.000000e+00 : f32
    %109 = vector.broadcast %cst_29 : f32 to vector<8x512xf32>
    %110 = arith.subf %109, %106 : vector<8x512xf32>
    %111 = arith.select %108, %106, %110 : vector<8x512xi1>, vector<8x512xf32>
    %c1_i32_30 = arith.constant 1 : i32
    %112 = tpu.dynamic_rotate %111 by %c1_i32_30 dim 0 : vector<8x512xf32>, i32 -> vector<8x512xf32>
    %113 = arith.maximumf %111, %112 : vector<8x512xf32>
    %c2_i32_31 = arith.constant 2 : i32
    %114 = tpu.dynamic_rotate %111 by %c2_i32_31 dim 0 : vector<8x512xf32>, i32 -> vector<8x512xf32>
    %115 = arith.maximumf %111, %114 : vector<8x512xf32>
    %116 = arith.addf %113, %115 : vector<8x512xf32>
    %c3_i32_32 = arith.constant 3 : i32
    %117 = tpu.dynamic_rotate %111 by %c3_i32_32 dim 0 : vector<8x512xf32>, i32 -> vector<8x512xf32>
    %118 = arith.maximumf %111, %117 : vector<8x512xf32>
    %119 = arith.addf %116, %118 : vector<8x512xf32>
    %c4_i32_33 = arith.constant 4 : i32
    %120 = tpu.dynamic_rotate %111 by %c4_i32_33 dim 0 : vector<8x512xf32>, i32 -> vector<8x512xf32>
    %121 = arith.maximumf %111, %120 : vector<8x512xf32>
    %cst_34 = arith.constant 5.000000e-01 : f32
    %122 = vector.broadcast %cst_34 : f32 to vector<8x512xf32>
    %123 = arith.mulf %122, %121 : vector<8x512xf32>
    %124 = arith.addf %119, %123 : vector<8x512xf32>
    %cst_35 = arith.constant 2.500000e-01 : f32
    %125 = vector.broadcast %cst_35 : f32 to vector<8x512xf32>
    %126 = arith.mulf %125, %111 : vector<8x512xf32>
    %cst_36 = arith.constant 0.388888896 : f32
    %127 = vector.broadcast %cst_36 : f32 to vector<8x512xf32>
    %128 = arith.addf %126, %127 : vector<8x512xf32>
    %129 = arith.mulf %128, %111 : vector<8x512xf32>
    %cst_37 = arith.constant 0.111111112 : f32
    %130 = vector.broadcast %cst_37 : f32 to vector<8x512xf32>
    %131 = arith.mulf %130, %124 : vector<8x512xf32>
    %132 = arith.subf %129, %131 : vector<8x512xf32>
    %133 = vector.extract_strided_slice %132 {offsets = [0, 0], sizes = [8, 128], strides = [1, 1]} : vector<8x512xf32> to vector<8x128xf32>
    %134 = arith.addf %71, %133 : vector<8x128xf32>
    %135 = vector.extract_strided_slice %132 {offsets = [0, 128], sizes = [8, 128], strides = [1, 1]} : vector<8x512xf32> to vector<8x128xf32>
    %136 = arith.addf %134, %135 : vector<8x128xf32>
    %137 = vector.extract_strided_slice %132 {offsets = [0, 256], sizes = [8, 128], strides = [1, 1]} : vector<8x512xf32> to vector<8x128xf32>
    %138 = arith.addf %136, %137 : vector<8x128xf32>
    %139 = vector.extract_strided_slice %132 {offsets = [0, 384], sizes = [8, 128], strides = [1, 1]} : vector<8x512xf32> to vector<8x128xf32>
    %140 = arith.addf %138, %139 : vector<8x128xf32>
    %c2_i32_38 = arith.constant 2 : i32
    %141 = vector.shape_cast %140 : vector<8x128xf32> to vector<1x8x128xf32>
    %c0_39 = arith.constant 0 : index
    %c0_40 = arith.constant 0 : index
    %c0_41 = arith.constant 0 : index
    %142 = vector.load %arg3[%c0_39, %c0_40, %c0_41] : memref<1x8x128xf32, #tpu.memory_space<vmem>>, vector<1x8x128xf32>
    tpu.vector_store %arg3[%c0_39, %c0_40, %c0_41], %141 {strides = array<i32>} : memref<1x8x128xf32, #tpu.memory_space<vmem>>, vector<1x8x128xf32>,
    return
  }
  func.func @transform_0(%arg0: i32) -> i32 {
    %c0_i32 = arith.constant 0 : i32
    %c0_i32_0 = arith.constant 0 : i32
    return %c0_i32 : i32
  }
  func.func @transform_1(%arg0: i32) -> (i32, i32) {
    %c0_i32 = arith.constant 0 : i32
    %c0_i32_0 = arith.constant 0 : i32
    return %c0_i32, %arg0 : i32, i32
  }
  func.func @transform_2(%arg0: i32) -> (i32, i32, i32) {
    %c0_i32 = arith.constant 0 : i32
    %c0_i32_0 = arith.constant 0 : i32
    %c0_i32_1 = arith.constant 0 : i32
    return %arg0, %c0_i32, %c0_i32_0 : i32, i32, i32
  }
}

</mosaic_0001>

<llo_original>
// kernel: adaptive_shaping_loss.1
$region0: #{adaptive_shaping_loss.1}
  #allocation0 [shape = 'u32[]', space=smem, size = 0x4, offset = 0x4, fixed_abs, tag = 'smem constant byte address 0x4 - core index']
  #allocation1 [shape = 'u32[144,128]{1,0:T(1,128)}', space=vmem, size = 0x12000, scoped, tag = 'internal scratch']
  %s0 = inlined_call_operand.vmem [shape: f32[2], index: 0, kind: input, shape index: {}]
  %s1 = inlined_call_operand.vmem [shape: f32[8,1024], index: 1, kind: input, shape index: {}]
  %s2 = inlined_call_operand.vmem [shape: f32[1,8,128], index: 2, kind: output, shape index: {}]
  %s3 = sld [smem:[#allocation0]]
  $region22: #{adaptive_shaping_loss.1} parent=0
    _
  %s5 = ssub.s32 1, %s3
  %s6 = scalar_select 0, %s5, %s3
  $region1: #{adaptive_shaping_loss.1} parent=0
    #allocation2 [shape = 'u8[512]{0}', space=smem, size = 0x200, scoped, tag = 'input window, operand 0, single buffered']
    #allocation3 [shape = 's32[1]{0}', space=sflag, size = 0x4, scoped, tag = 'scoped memory for adaptive_shaping_loss.1']
    %7 = vsyncpa [#allocation3], 0
    // Predicated region
    $region2: #{adaptive_shaping_loss.1} parent=1 // pred_check
      _
    $region3: #{adaptive_shaping_loss.1} parent=1 // pred_check_branch
      %9 = sbr.rel (0) target = $region5
    $region4: #{adaptive_shaping_loss.1} parent=1 // pred_region
      %s11 = ssub.s32 16, 16
      %12 = vsyncadd [#allocation3], %s11
      %s14 = sshll.u32 %s0, 4
      %s15 = int_to_ptr.vmem [resolvable:$true] %s14
      %17 = dma.vmem_to_smem %s15, 16, [#allocation2], [#allocation3]
    $region5: #{adaptive_shaping_loss.1} parent=1 // pred_fallthru
      _
    // Predicated region
    $region6: #{adaptive_shaping_loss.1} parent=1 // pred_check
      _
    $region7: #{adaptive_shaping_loss.1} parent=1 // pred_check_branch
      %19 = sbr.rel (0) target = $region9
    $region8: #{adaptive_shaping_loss.1} parent=1 // pred_region
      _
    $region9: #{adaptive_shaping_loss.1} parent=1 // pred_fallthru
      _
    // Predicated region
    $region10: #{adaptive_shaping_loss.1} parent=1 // pred_check
      _
    $region11: #{adaptive_shaping_loss.1} parent=1 // pred_check_branch
      %21 = sbr.rel (0) target = $region13
    $region12: #{adaptive_shaping_loss.1} parent=1 // pred_region
      %22 = dma.done [#allocation3], 16
    $region13: #{adaptive_shaping_loss.1} parent=1 // pred_fallthru
      _
    %23 = sfence
    %s24 = sld [smem:[#allocation2]]
    %s25 = sld [smem:[#allocation2 + $0x1]]
    %v26 = vld [vmem:[%s1] sm:$0xff]
    %v27 = vld [vmem:[%s1 + $0x8] sm:$0xff]
    %v28 = vld [vmem:[%s1 + $0x10] sm:$0xff]
    %v29 = vld [vmem:[%s1 + $0x18] sm:$0xff]
    %v30 = vstv %s24
    %v31 = vsub.f32 %v26, %v30
    %v32 = vsub.f32 %v27, %v30
    %v33 = vsub.f32 %v28, %v30
    %v34 = vsub.f32 %v29, %v30
    %v35 = vstv %s25
    %v36 = vmul.f32 %v31, %v35
    %v37 = vmul.f32 %v32, %v35
    %v38 = vmul.f32 %v33, %v35
    %v39 = vmul.f32 %v34, %v35
    %v40 = vand.u32 2147483647, %v36
    %v41 = vand.u32 2147483647, %v37
    %v42 = vand.u32 2147483647, %v38
    %v43 = vand.u32 2147483647, %v39
    %v44 = vmul.f32 %v40, 0.3275911
    %v45 = vmul.f32 %v41, 0.3275911
    %v46 = vmul.f32 %v42, 0.3275911
    %v47 = vmul.f32 %v43, 0.3275911
    %v48 = vadd.f32 %v44, 1.0
    %v49 = vadd.f32 %v45, 1.0
    %v50 = vadd.f32 %v46, 1.0
    %v51 = vadd.f32 %v47, 1.0
    %v52 = vrcp.pop %v48
    %v53 = vrcp.pop %v49
    %v54 = vrcp.pop %v50
    %v55 = vrcp.pop %v51
    %v56 = vmul.f32 %v52, 1.0614054
    %v57 = vmul.f32 %v53, 1.0614054
    %v58 = vmul.f32 %v54, 1.0614054
    %v59 = vmul.f32 %v55, 1.0614054
    %v60 = vadd.f32 %v56, -1.4531521
    %v61 = vadd.f32 %v57, -1.4531521
    %v62 = vadd.f32 %v58, -1.4531521
    %v63 = vadd.f32 %v59, -1.4531521
    %v64 = vmul.f32 %v60, %v52
    %v65 = vmul.f32 %v61, %v53
    %v66 = vmul.f32 %v62, %v54
    %v67 = vmul.f32 %v63, %v55
    %v68 = vadd.f32 %v64, 1.4214138
    %v69 = vadd.f32 %v65, 1.4214138
    %v70 = vadd.f32 %v66, 1.4214138
    %v71 = vadd.f32 %v67, 1.4214138
    %v72 = vmul.f32 %v68, %v52
    %v73 = vmul.f32 %v69, %v53
    %v74 = vmul.f32 %v70, %v54
    %v75 = vmul.f32 %v71, %v55
    %v76 = vadd.f32 %v72, -0.28449672
    %v77 = vadd.f32 %v73, -0.28449672
    %v78 = vadd.f32 %v74, -0.28449672
    %v79 = vadd.f32 %v75, -0.28449672
    %v80 = vmul.f32 %v76, %v52
    %v81 = vmul.f32 %v77, %v53
    %v82 = vmul.f32 %v78, %v54
    %v83 = vmul.f32 %v79, %v55
    %v84 = vadd.f32 %v80, 0.2548296
    %v85 = vadd.f32 %v81, 0.2548296
    %v86 = vadd.f32 %v82, 0.2548296
    %v87 = vadd.f32 %v83, 0.2548296
    %v88 = vmul.f32 %v84, %v52
    %v89 = vmul.f32 %v85, %v53
    %v90 = vmul.f32 %v86, %v54
    %v91 = vmul.f32 %v87, %v55
    %v92 = vmul.f32 %v40, %v40
    %v93 = vmul.f32 %v41, %v41
    %v94 = vmul.f32 %v42, %v42
    %v95 = vmul.f32 %v43, %v43
    %v96 = vsub.f32 0.0, %v92
    %v97 = vsub.f32 0.0, %v93
    %v98 = vsub.f32 0.0, %v94
    %v99 = vsub.f32 0.0, %v95
    %v100 = vmul.f32 %v96, 1.442695
    %v101 = vpow.pop %v100
    %v102 = vmul.f32 %v97, 1.442695
    %v103 = vpow.pop %v102
    %v104 = vmul.f32 %v98, 1.442695
    %v105 = vpow.pop %v104
    %v106 = vmul.f32 %v99, 1.442695
    %v107 = vpow.pop %v106
    %v108 = vmul.f32 %v88, %v101
    %v109 = vmul.f32 %v89, %v103
    %v110 = vmul.f32 %v90, %v105
    %v111 = vmul.f32 %v91, %v107
    %v112 = vsub.f32 1.0, %v108
    %v113 = vsub.f32 1.0, %v109
    %v114 = vsub.f32 1.0, %v110
    %v115 = vsub.f32 1.0, %v111
    %vm116 = vcmp.ge.f32.partialorder %v36, 0.0
    %vm117 = vcmp.ge.f32.partialorder %v37, 0.0
    %vm118 = vcmp.ge.f32.partialorder %v38, 0.0
    %vm119 = vcmp.ge.f32.partialorder %v39, 0.0
    %v120 = vsub.f32 0.0, %v112
    %v121 = vsub.f32 0.0, %v113
    %v122 = vsub.f32 0.0, %v114
    %v123 = vsub.f32 0.0, %v115
    %v124 = vsel %vm116, %v112, %v120
    %v125 = vsel %vm117, %v113, %v121
    %v126 = vsel %vm118, %v114, %v122
    %v127 = vsel %vm119, %v115, %v123
    %v128 = vrot.slane %v124, 7
    %v129 = vrot.slane %v125, 7
    %v130 = vrot.slane %v126, 7
    %v131 = vrot.slane %v127, 7
    %v132 = vmax.f32 %v124, %v128
    %v133 = vmax.f32 %v125, %v129
    %v134 = vmax.f32 %v126, %v130
    %v135 = vmax.f32 %v127, %v131
    %v136 = vrot.slane %v124, 6
    %v137 = vrot.slane %v125, 6
    %v138 = vrot.slane %v126, 6
    %v139 = vrot.slane %v127, 6
    %v140 = vmax.f32 %v124, %v136
    %v141 = vmax.f32 %v125, %v137
    %v142 = vmax.f32 %v126, %v138
    %v143 = vmax.f32 %v127, %v139
    %v144 = vadd.f32 %v132, %v140
    %v145 = vadd.f32 %v133, %v141
    %v146 = vadd.f32 %v134, %v142
    %v147 = vadd.f32 %v135, %v143
    %v148 = vrot.slane %v124, 5
    %v149 = vrot.slane %v125, 5
    %v150 = vrot.slane %v126, 5
    %v151 = vrot.slane %v127, 5
    %v152 = vmax.f32 %v124, %v148
    %v153 = vmax.f32 %v125, %v149
    %v154 = vmax.f32 %v126, %v150
    %v155 = vmax.f32 %v127, %v151
    %v156 = vadd.f32 %v144, %v152
    %v157 = vadd.f32 %v145, %v153
    %v158 = vadd.f32 %v146, %v154
    %v159 = vadd.f32 %v147, %v155
    %v160 = vrot.slane %v124, 4
    %v161 = vrot.slane %v125, 4
    %v162 = vrot.slane %v126, 4
    %v163 = vrot.slane %v127, 4
    %v164 = vmax.f32 %v124, %v160
    %v165 = vmax.f32 %v125, %v161
    %v166 = vmax.f32 %v126, %v162
    %v167 = vmax.f32 %v127, %v163
    %v168 = vmul.f32 %v164, 0.5
    %v169 = vmul.f32 %v165, 0.5
    %v170 = vmul.f32 %v166, 0.5
    %v171 = vmul.f32 %v167, 0.5
    %v172 = vadd.f32 %v156, %v168
    %v173 = vadd.f32 %v157, %v169
    %v174 = vadd.f32 %v158, %v170
    %v175 = vadd.f32 %v159, %v171
    %v176 = vmul.f32 %v124, 0.25
    %v177 = vmul.f32 %v125, 0.25
    %v178 = vmul.f32 %v126, 0.25
    %v179 = vmul.f32 %v127, 0.25
    %v180 = vadd.f32 %v176, 0.3888889
    %v181 = vadd.f32 %v177, 0.3888889
    %v182 = vadd.f32 %v178, 0.3888889
    %v183 = vadd.f32 %v179, 0.3888889
    %v184 = vmul.f32 %v180, %v124
    %v185 = vmul.f32 %v181, %v125
    %v186 = vmul.f32 %v182, %v126
    %v187 = vmul.f32 %v183, %v127
    %v188 = vmul.f32 %v172, 0.11111111
    %v189 = vmul.f32 %v173, 0.11111111
    %v190 = vmul.f32 %v174, 0.11111111
    %v191 = vmul.f32 %v175, 0.11111111
    %v192 = vsub.f32 %v184, %v188
    %v193 = vsub.f32 %v185, %v189
    %v194 = vsub.f32 %v186, %v190
    %v195 = vsub.f32 %v187, %v191
    %v196 = vadd.f32 %v192, 0.0
    %v197 = vadd.f32 %v196, %v193
    %v198 = vadd.f32 %v197, %v194
    %v199 = vadd.f32 %v198, %v195
    %s200 = scalar_lea.vmem %s1, 32
    %v201 = vld [vmem:[%s200] sm:$0xff]
    %v202 = vld [vmem:[%s200 + $0x8] sm:$0xff]
    %v203 = vld [vmem:[%s200 + $0x10] sm:$0xff]
    %v204 = vld [vmem:[%s200 + $0x18] sm:$0xff]
    %v205 = vsub.f32 %v201, %v30
    %v206 = vsub.f32 %v202, %v30
    %v207 = vsub.f32 %v203, %v30
    %v208 = vsub.f32 %v204, %v30
    %v209 = vmul.f32 %v205, %v35
    %v210 = vmul.f32 %v206, %v35
    %v211 = vmul.f32 %v207, %v35
    %v212 = vmul.f32 %v208, %v35
    %v213 = vand.u32 2147483647, %v209
    %v214 = vand.u32 2147483647, %v210
    %v215 = vand.u32 2147483647, %v211
    %v216 = vand.u32 2147483647, %v212
    %v217 = vmul.f32 %v213, 0.3275911
    %v218 = vmul.f32 %v214, 0.3275911
    %v219 = vmul.f32 %v215, 0.3275911
    %v220 = vmul.f32 %v216, 0.3275911
    %v221 = vadd.f32 %v217, 1.0
    %v222 = vadd.f32 %v218, 1.0
    %v223 = vadd.f32 %v219, 1.0
    %v224 = vadd.f32 %v220, 1.0
    %v225 = vrcp.pop %v221
    %v226 = vrcp.pop %v222
    %v227 = vrcp.pop %v223
    %v228 = vrcp.pop %v224
    %v229 = vmul.f32 %v225, 1.0614054
    %v230 = vmul.f32 %v226, 1.0614054
    %v231 = vmul.f32 %v227, 1.0614054
    %v232 = vmul.f32 %v228, 1.0614054
    %v233 = vadd.f32 %v229, -1.4531521
    %v234 = vadd.f32 %v230, -1.4531521
    %v235 = vadd.f32 %v231, -1.4531521
    %v236 = vadd.f32 %v232, -1.4531521
    %v237 = vmul.f32 %v233, %v225
    %v238 = vmul.f32 %v234, %v226
    %v239 = vmul.f32 %v235, %v227
    %v240 = vmul.f32 %v236, %v228
    %v241 = vadd.f32 %v237, 1.4214138
    %v242 = vadd.f32 %v238, 1.4214138
    %v243 = vadd.f32 %v239, 1.4214138
    %v244 = vadd.f32 %v240, 1.4214138
    %v245 = vmul.f32 %v241, %v225
    %v246 = vmul.f32 %v242, %v226
    %v247 = vmul.f32 %v243, %v227
    %v248 = vmul.f32 %v244, %v228
    %v249 = vadd.f32 %v245, -0.28449672
    %v250 = vadd.f32 %v246, -0.28449672
    %v251 = vadd.f32 %v247, -0.28449672
    %v252 = vadd.f32 %v248, -0.28449672
    %v253 = vmul.f32 %v249, %v225
    %v254 = vmul.f32 %v250, %v226
    %v255 = vmul.f32 %v251, %v227
    %v256 = vmul.f32 %v252, %v228
    %v257 = vadd.f32 %v253, 0.2548296
    %v258 = vadd.f32 %v254, 0.2548296
    %v259 = vadd.f32 %v255, 0.2548296
    %v260 = vadd.f32 %v256, 0.2548296
    %v261 = vmul.f32 %v257, %v225
    %v262 = vmul.f32 %v258, %v226
    %v263 = vmul.f32 %v259, %v227
    %v264 = vmul.f32 %v260, %v228
    %v265 = vmul.f32 %v213, %v213
    %v266 = vmul.f32 %v214, %v214
    %v267 = vmul.f32 %v215, %v215
    %v268 = vmul.f32 %v216, %v216
    %v269 = vsub.f32 0.0, %v265
    %v270 = vsub.f32 0.0, %v266
    %v271 = vsub.f32 0.0, %v267
    %v272 = vsub.f32 0.0, %v268
    %v273 = vmul.f32 %v269, 1.442695
    %v274 = vpow.pop %v273
    %v275 = vmul.f32 %v270, 1.442695
    %v276 = vpow.pop %v275
    %v277 = vmul.f32 %v271, 1.442695
    %v278 = vpow.pop %v277
    %v279 = vmul.f32 %v272, 1.442695
    %v280 = vpow.pop %v279
    %v281 = vmul.f32 %v261, %v274
    %v282 = vmul.f32 %v262, %v276
    %v283 = vmul.f32 %v263, %v278
    %v284 = vmul.f32 %v264, %v280
    %v285 = vsub.f32 1.0, %v281
    %v286 = vsub.f32 1.0, %v282
    %v287 = vsub.f32 1.0, %v283
    %v288 = vsub.f32 1.0, %v284
    %vm289 = vcmp.ge.f32.partialorder %v209, 0.0
    %vm290 = vcmp.ge.f32.partialorder %v210, 0.0
    %vm291 = vcmp.ge.f32.partialorder %v211, 0.0
    %vm292 = vcmp.ge.f32.partialorder %v212, 0.0
    %v293 = vsub.f32 0.0, %v285
    %v294 = vsub.f32 0.0, %v286
    %v295 = vsub.f32 0.0, %v287
    %v296 = vsub.f32 0.0, %v288
    %v297 = vsel %vm289, %v285, %v293
    %v298 = vsel %vm290, %v286, %v294
    %v299 = vsel %vm291, %v287, %v295
    %v300 = vsel %vm292, %v288, %v296
    %v301 = vrot.slane %v297, 7
    %v302 = vrot.slane %v298, 7
    %v303 = vrot.slane %v299, 7
    %v304 = vrot.slane %v300, 7
    %v305 = vmax.f32 %v297, %v301
    %v306 = vmax.f32 %v298, %v302
    %v307 = vmax.f32 %v299, %v303
    %v308 = vmax.f32 %v300, %v304
    %v309 = vrot.slane %v297, 6
    %v310 = vrot.slane %v298, 6
    %v311 = vrot.slane %v299, 6
    %v312 = vrot.slane %v300, 6
    %v313 = vmax.f32 %v297, %v309
    %v314 = vmax.f32 %v298, %v310
    %v315 = vmax.f32 %v299, %v311
    %v316 = vmax.f32 %v300, %v312
    %v317 = vadd.f32 %v305, %v313
    %v318 = vadd.f32 %v306, %v314
    %v319 = vadd.f32 %v307, %v315
    %v320 = vadd.f32 %v308, %v316
    %v321 = vrot.slane %v297, 5
    %v322 = vrot.slane %v298, 5
    %v323 = vrot.slane %v299, 5
    %v324 = vrot.slane %v300, 5
    %v325 = vmax.f32 %v297, %v321
    %v326 = vmax.f32 %v298, %v322
    %v327 = vmax.f32 %v299, %v323
    %v328 = vmax.f32 %v300, %v324
    %v329 = vadd.f32 %v317, %v325
    %v330 = vadd.f32 %v318, %v326
    %v331 = vadd.f32 %v319, %v327
    %v332 = vadd.f32 %v320, %v328
    %v333 = vrot.slane %v297, 4
    %v334 = vrot.slane %v298, 4
    %v335 = vrot.slane %v299, 4
    %v336 = vrot.slane %v300, 4
    %v337 = vmax.f32 %v297, %v333
    %v338 = vmax.f32 %v298, %v334
    %v339 = vmax.f32 %v299, %v335
    %v340 = vmax.f32 %v300, %v336
    %v341 = vmul.f32 %v337, 0.5
    %v342 = vmul.f32 %v338, 0.5
    %v343 = vmul.f32 %v339, 0.5
    %v344 = vmul.f32 %v340, 0.5
    %v345 = vadd.f32 %v329, %v341
    %v346 = vadd.f32 %v330, %v342
    %v347 = vadd.f32 %v331, %v343
    %v348 = vadd.f32 %v332, %v344
    %v349 = vmul.f32 %v297, 0.25
    %v350 = vmul.f32 %v298, 0.25
    %v351 = vmul.f32 %v299, 0.25
    %v352 = vmul.f32 %v300, 0.25
    %v353 = vadd.f32 %v349, 0.3888889
    %v354 = vadd.f32 %v350, 0.3888889
    %v355 = vadd.f32 %v351, 0.3888889
    %v356 = vadd.f32 %v352, 0.3888889
    %v357 = vmul.f32 %v353, %v297
    %v358 = vmul.f32 %v354, %v298
    %v359 = vmul.f32 %v355, %v299
    %v360 = vmul.f32 %v356, %v300
    %v361 = vmul.f32 %v345, 0.11111111
    %v362 = vmul.f32 %v346, 0.11111111
    %v363 = vmul.f32 %v347, 0.11111111
    %v364 = vmul.f32 %v348, 0.11111111
    %v365 = vsub.f32 %v357, %v361
    %v366 = vsub.f32 %v358, %v362
    %v367 = vsub.f32 %v359, %v363
    %v368 = vsub.f32 %v360, %v364
    %v369 = vadd.f32 %v199, %v365
    %v370 = vadd.f32 %v369, %v366
    %v371 = vadd.f32 %v370, %v367
    %v372 = vadd.f32 %v371, %v368
    %373 = vst [vmem:[%s2] sm:$0xff] %v372
    // Predicated region
    $region14: #{adaptive_shaping_loss.1} parent=1 // pred_check
      _
    $region15: #{adaptive_shaping_loss.1} parent=1 // pred_check_branch
      %375 = sbr.rel (0) target = $region17
    $region16: #{adaptive_shaping_loss.1} parent=1 // pred_region
      _
    $region17: #{adaptive_shaping_loss.1} parent=1 // pred_fallthru
      _
    // Predicated region
    $region18: #{adaptive_shaping_loss.1} parent=1 // pred_check
      _
    $region19: #{adaptive_shaping_loss.1} parent=1 // pred_check_branch
      %377 = sbr.rel (0) target = $region21
    $region20: #{adaptive_shaping_loss.1} parent=1 // pred_region
      _
    $region21: #{adaptive_shaping_loss.1} parent=1 // pred_fallthru
      _
    %378 = vsyncpa [#allocation3], 1

</llo_original>
